<compile_context>
chip_gen: v5e
topology: v5e:2x2
jax: 0.10.0
libtpu: 0.0.40
codegen_flags: <defaults>
</compile_context>

<pallas_src>
import functools

import jax
import jax.numpy as jnp
from jax.experimental import pallas as pl
from jax.experimental.pallas import tpu as pltpu

_LANE = 128
_SUBLANE = 8


def time_embed_kernel(t_ref, freq_ref, phase_ref, w1_ref, b1_ref, w2_ref, b2_ref, o_ref):
    # t_ref:     (tile_B, 1)         float32 timesteps
    # freq_ref:  (1, D)              inv_freqs duplicated: [f | f]
    # phase_ref: (1, D)              [0 ... 0 | pi/2 ... pi/2]
    # w1_ref:    (D, S_pad)    b1_ref: (1, S_pad)
    # w2_ref:    (S_pad, S_pad) b2_ref: (1, S_pad)
    # o_ref:     (tile_B, S_pad)     lane-dense output (S_pad multiple of 128)
    emb = jnp.sin(t_ref[...] * freq_ref[...] + phase_ref[...])          # (tile_B, D) = [sin | cos]
    h = jnp.dot(emb, w1_ref[...], preferred_element_type=jnp.float32) + b1_ref[...]
    h = h * jax.nn.sigmoid(h)                                           # SiLU
    out = jnp.dot(h, w2_ref[...], preferred_element_type=jnp.float32) + b2_ref[...]
    o_ref[...] = (out * jax.nn.sigmoid(out)).astype(o_ref.dtype)        # SiLU


def prepare_time_embedding_params(inv_freqs, w1, b1, w2, b2):
    """One-time parameter prep (casts, padding, phase table).

    Call once and reuse for every forward call — keep it OUT of the hot path.
    """
    half = inv_freqs.shape[0]
    d = 2 * half                       # time_embed_dim
    s = w1.shape[1]                    # scaled_time_embed_dim
    s_pad = max(_LANE, ((s + _LANE - 1) // _LANE) * _LANE)

    inv_freqs = inv_freqs.astype(jnp.float32)
    # cos(x) == sin(x + pi/2): duplicate frequencies + phase table so the kernel
    # does a single sin() and no lane-axis concatenate.
    freq = jnp.concatenate([inv_freqs, inv_freqs]).reshape(1, d)
    phase = jnp.concatenate(
        [jnp.zeros((half,), jnp.float32),
         jnp.full((half,), jnp.pi / 2, jnp.float32)]).reshape(1, d)

    # Zero-pad the MLP to a 128-lane-dense width.  Padded columns stay exactly
    # zero through both layers (silu(0) == 0, padded w2 rows/cols are 0), so
    # slicing them off afterwards is exact.
    w1p = jnp.zeros((d, s_pad), jnp.float32).at[:, :s].set(w1.astype(jnp.float32))
    b1p = jnp.zeros((1, s_pad), jnp.float32).at[:, :s].set(b1.reshape(1, s).astype(jnp.float32))
    w2p = jnp.zeros((s_pad, s_pad), jnp.float32).at[:s, :s].set(w2.astype(jnp.float32))
    b2p = jnp.zeros((1, s_pad), jnp.float32).at[:, :s].set(b2.reshape(1, s).astype(jnp.float32))
    return dict(freq=freq, phase=phase, w1=w1p, b1=b1p, w2=w2p, b2=b2p)


def _pick_tile_b(batch_padded, max_tile=512):
    # Largest multiple-of-8 divisor of the (padded) batch — bigger tiles
    # amortize the ~0.35us per-step overhead.
    for cand in (1024, 512, 256, 128, 64, 32, 16, 8):
        if cand <= max_tile and batch_padded % cand == 0:
            return cand
    return batch_padded


def sinusoidal_time_embedding(timesteps, params, *, out_dim, tile_b=None):
    """timesteps: (B,) float/int; returns (B, out_dim) float32."""
    batch = timesteps.shape[0]
    d = params["freq"].shape[1]
    s_pad = params["w1"].shape[1]

    # Pad batch up to a multiple of the sublane count so any batch size works.
    batch_padded = ((batch + _SUBLANE - 1) // _SUBLANE) * _SUBLANE
    if tile_b is None:
        tile_b = _pick_tile_b(batch_padded)
    if batch_padded % tile_b != 0:
        tile_b = _pick_tile_b(batch_padded)

    t2 = timesteps.reshape(batch, 1).astype(jnp.float32)
    if batch_padded != batch:
        t2 = jnp.pad(t2, ((0, batch_padded - batch), (0, 0)))

    const = lambda i: (0, 0)   # weights/tables: same block every step -> stay VMEM-resident

    out = pl.pallas_call(
        time_embed_kernel,
        out_shape=jax.ShapeDtypeStruct((batch_padded, s_pad), jnp.float32),
        grid=(batch_padded // tile_b,),
        in_specs=[
            pl.BlockSpec((tile_b, 1), lambda i: (i, 0)),   # timesteps: tiled over batch
            pl.BlockSpec((1, d), const),                   # duplicated inv_freqs
            pl.BlockSpec((1, d), const),                   # phase table
            pl.BlockSpec(params["w1"].shape, const),
            pl.BlockSpec((1, s_pad), const),
            pl.BlockSpec(params["w2"].shape, const),
            pl.BlockSpec((1, s_pad), const),
        ],
        out_specs=pl.BlockSpec((tile_b, s_pad), lambda i: (i, 0)),
        compiler_params=pltpu.CompilerParams(
            dimension_semantics=("parallel",)),            # shard batch grid across TCs (v7x)
    )(t2, params["freq"], params["phase"],
      params["w1"], params["b1"], params["w2"], params["b2"])

    return out[:batch, :out_dim]   # drop batch + lane padding


def reference(timesteps, inv_freqs, w1, b1, w2, b2):
    freqs = timesteps[:, None] * inv_freqs[None, :]
    emb = jnp.concatenate([jnp.sin(freqs), jnp.cos(freqs)], axis=-1)
    h = emb @ w1 + b1
    h = h * jax.nn.sigmoid(h)
    out = h @ w2 + b2
    return out * jax.nn.sigmoid(out)


if __name__ == "__main__":
    time_embed_dim = 32
    scaled_time_embed_dim = 64
    B = 64
    TILE_B = 32   # 2 grid steps -> DMA pipelining actually exercised, still small

    # Non-learnable sinusoidal inverse frequencies (same formula as the module).
    inv_freqs = 1.0 / (10000.0 ** (jnp.arange(0, time_embed_dim, 2, dtype=jnp.float32)
                                   / (time_embed_dim / 2)))

    key = jax.random.PRNGKey(0)
    k_t, k_w1, k_b1, k_w2, k_b2 = jax.random.split(key, 5)

    # Deterministic synthetic parameters (shapes from nn.Linear defs, stored (in, out)).
    w1 = jax.random.normal(k_w1, (time_embed_dim, scaled_time_embed_dim), jnp.float32) * 0.05
    b1 = jax.random.normal(k_b1, (scaled_time_embed_dim,), jnp.float32) * 0.05
    w2 = jax.random.normal(k_w2, (scaled_time_embed_dim, scaled_time_embed_dim), jnp.float32) * 0.05
    b2 = jax.random.normal(k_b2, (scaled_time_embed_dim,), jnp.float32) * 0.05

    # Diffusion timesteps: integers cast to float, like torch usage.
    timesteps = jax.random.randint(k_t, (B,), 0, 1000).astype(jnp.float32)

    # One-time parameter prep (outside the hot path).
    params = prepare_time_embedding_params(inv_freqs, w1, b1, w2, b2)

    fwd = jax.jit(functools.partial(sinusoidal_time_embedding,
                                    out_dim=scaled_time_embed_dim, tile_b=TILE_B))
    out = jax.block_until_ready(fwd(timesteps, params))

    ref = reference(timesteps, inv_freqs, w1, b1, w2, b2)
    assert out.shape == (B, scaled_time_embed_dim)
    # Tolerance covers the f32 rounding of cos(x) -> sin(x + pi/2) for args up to ~1000.
    err = float(jnp.max(jnp.abs(out - ref)))
    assert err < 5e-4, f"max abs err {err}"

    print("KERNEL_OK")
</pallas_src>

<mosaic_0001>
module attributes {stable_mosaic.version = 11 : i64} {
  func.func @time_embed_kernel(%arg0: i32, %arg1: memref<32x1xf32, #tpu.memory_space<vmem>>, %arg2: memref<1x32xf32, #tpu.memory_space<vmem>>, %arg3: memref<1x32xf32, #tpu.memory_space<vmem>>, %arg4: memref<32x128xf32, #tpu.memory_space<vmem>>, %arg5: memref<1x128xf32, #tpu.memory_space<vmem>>, %arg6: memref<128x128xf32, #tpu.memory_space<vmem>>, %arg7: memref<1x128xf32, #tpu.memory_space<vmem>>, %arg8: memref<32x128xf32, #tpu.memory_space<vmem>>) attributes {dimension_semantics = [#tpu.dimension_semantics<parallel>], iteration_bounds = array<i64: 2>, scalar_prefetch = 0 : i64, scratch_operands = 0 : i64, tpu.core_type = #tpu.core_type<tc>, window_params = [{transform_indices = @transform_0, window_bounds = array<i64: 32, 1>}, {pipeline_mode = #tpu.pipeline_mode<synchronous>, transform_indices = @transform_1, window_bounds = array<i64: 1, 32>}, {pipeline_mode = #tpu.pipeline_mode<synchronous>, transform_indices = @transform_2, window_bounds = array<i64: 1, 32>}, {pipeline_mode = #tpu.pipeline_mode<synchronous>, transform_indices = @transform_3, window_bounds = array<i64: 32, 128>}, {pipeline_mode = #tpu.pipeline_mode<synchronous>, transform_indices = @transform_4, window_bounds = array<i64: 1, 128>}, {pipeline_mode = #tpu.pipeline_mode<synchronous>, transform_indices = @transform_5, window_bounds = array<i64: 128, 128>}, {pipeline_mode = #tpu.pipeline_mode<synchronous>, transform_indices = @transform_6, window_bounds = array<i64: 1, 128>}, {transform_indices = @transform_7, window_bounds = array<i64: 32, 128>}]} {
    %c0 = arith.constant 0 : index
    %c0_0 = arith.constant 0 : index
    %0 = vector.load %arg1[%c0, %c0_0] : memref<32x1xf32, #tpu.memory_space<vmem>>, vector<32x1xf32>
    %c0_1 = arith.constant 0 : index
    %c0_2 = arith.constant 0 : index
    %1 = vector.load %arg2[%c0_1, %c0_2] : memref<1x32xf32, #tpu.memory_space<vmem>>, vector<1x32xf32>
    %2 = vector.broadcast %0 : vector<32x1xf32> to vector<32x32xf32>
    %3 = vector.broadcast %1 : vector<1x32xf32> to vector<32x32xf32>
    %4 = arith.mulf %2, %3 : vector<32x32xf32>
    %c0_3 = arith.constant 0 : index
    %c0_4 = arith.constant 0 : index
    %5 = vector.load %arg3[%c0_3, %c0_4] : memref<1x32xf32, #tpu.memory_space<vmem>>, vector<1x32xf32>
    %6 = vector.broadcast %5 : vector<1x32xf32> to vector<32x32xf32>
    %7 = arith.addf %4, %6 : vector<32x32xf32>
    %8 = math.sin %7 : vector<32x32xf32>
    %c0_5 = arith.constant 0 : index
    %c0_6 = arith.constant 0 : index
    %9 = vector.load %arg4[%c0_5, %c0_6] : memref<32x128xf32, #tpu.memory_space<vmem>>, vector<32x128xf32>
    %cst = arith.constant dense<0.000000e+00> : vector<32x128xf32>
    %10 = tpu.matmul %8, %9, %cst {dimension_numbers = #tpu.dot_dimension_numbers<[1], [0], [0], [1], [0, 0, 1, 1], [], []>} : vector<32x32xf32>, vector<32x128xf32>, vector<32x128xf32> -> vector<32x128xf32>
    %c0_7 = arith.constant 0 : index
    %c0_8 = arith.constant 0 : index
    %11 = vector.load %arg5[%c0_7, %c0_8] : memref<1x128xf32, #tpu.memory_space<vmem>>, vector<1x128xf32>
    %12 = vector.broadcast %11 : vector<1x128xf32> to vector<32x128xf32>
    %13 = arith.addf %10, %12 : vector<32x128xf32>
    %14 = arith.negf %13 : vector<32x128xf32>
    %15 = math.exp %14 : vector<32x128xf32>
    %cst_9 = arith.constant 1.000000e+00 : f32
    %16 = vector.broadcast %cst_9 : f32 to vector<32x128xf32>
    %17 = arith.addf %16, %15 : vector<32x128xf32>
    %18 = arith.divf %16, %17 : vector<32x128xf32>
    %19 = arith.mulf %13, %18 : vector<32x128xf32>
    %c0_10 = arith.constant 0 : index
    %c0_11 = arith.constant 0 : index
    %20 = vector.load %arg6[%c0_10, %c0_11] : memref<128x128xf32, #tpu.memory_space<vmem>>, vector<128x128xf32>
    %cst_12 = arith.constant dense<0.000000e+00> : vector<32x128xf32>
    %21 = tpu.matmul %19, %20, %cst_12 {dimension_numbers = #tpu.dot_dimension_numbers<[1], [0], [0], [1], [0, 0, 1, 1], [], []>} : vector<32x128xf32>, vector<128x128xf32>, vector<32x128xf32> -> vector<32x128xf32>
    %c0_13 = arith.constant 0 : index
    %c0_14 = arith.constant 0 : index
    %22 = vector.load %arg7[%c0_13, %c0_14] : memref<1x128xf32, #tpu.memory_space<vmem>>, vector<1x128xf32>
    %23 = vector.broadcast %22 : vector<1x128xf32> to vector<32x128xf32>
    %24 = arith.addf %21, %23 : vector<32x128xf32>
    %25 = arith.negf %24 : vector<32x128xf32>
    %26 = math.exp %25 : vector<32x128xf32>
    %cst_15 = arith.constant 1.000000e+00 : f32
    %27 = vector.broadcast %cst_15 : f32 to vector<32x128xf32>
    %28 = arith.addf %27, %26 : vector<32x128xf32>
    %29 = arith.divf %27, %28 : vector<32x128xf32>
    %30 = arith.mulf %24, %29 : vector<32x128xf32>
    %c0_16 = arith.constant 0 : index
    %c0_17 = arith.constant 0 : index
    %31 = vector.load %arg8[%c0_16, %c0_17] : memref<32x128xf32, #tpu.memory_space<vmem>>, vector<32x128xf32>
    tpu.vector_store %arg8[%c0_16, %c0_17], %30 {strides = array<i32>} : memref<32x128xf32, #tpu.memory_space<vmem>>, vector<32x128xf32>,
    return
  }
  func.func @transform_0(%arg0: i32) -> (i32, i32) {
    %c0_i32 = arith.constant 0 : i32
    %c0_i32_0 = arith.constant 0 : i32
    return %arg0, %c0_i32 : i32, i32
  }
  func.func @transform_1(%arg0: i32) -> (i32, i32) {
    %c0_i32 = arith.constant 0 : i32
    %c0_i32_0 = arith.constant 0 : i32
    %c0_i32_1 = arith.constant 0 : i32
    return %c0_i32, %c0_i32_0 : i32, i32
  }
  func.func @transform_2(%arg0: i32) -> (i32, i32) {
    %c0_i32 = arith.constant 0 : i32
    %c0_i32_0 = arith.constant 0 : i32
    %c0_i32_1 = arith.constant 0 : i32
    return %c0_i32, %c0_i32_0 : i32, i32
  }
  func.func @transform_3(%arg0: i32) -> (i32, i32) {
    %c0_i32 = arith.constant 0 : i32
    %c0_i32_0 = arith.constant 0 : i32
    %c0_i32_1 = arith.constant 0 : i32
    return %c0_i32, %c0_i32_0 : i32, i32
  }
  func.func @transform_4(%arg0: i32) -> (i32, i32) {
    %c0_i32 = arith.constant 0 : i32
    %c0_i32_0 = arith.constant 0 : i32
    %c0_i32_1 = arith.constant 0 : i32
    return %c0_i32, %c0_i32_0 : i32, i32
  }
  func.func @transform_5(%arg0: i32) -> (i32, i32) {
    %c0_i32 = arith.constant 0 : i32
    %c0_i32_0 = arith.constant 0 : i32
    %c0_i32_1 = arith.constant 0 : i32
    return %c0_i32, %c0_i32_0 : i32, i32
  }
  func.func @transform_6(%arg0: i32) -> (i32, i32) {
    %c0_i32 = arith.constant 0 : i32
    %c0_i32_0 = arith.constant 0 : i32
    %c0_i32_1 = arith.constant 0 : i32
    return %c0_i32, %c0_i32_0 : i32, i32
  }
  func.func @transform_7(%arg0: i32) -> (i32, i32) {
    %c0_i32 = arith.constant 0 : i32
    %c0_i32_0 = arith.constant 0 : i32
    return %arg0, %c0_i32 : i32, i32
  }
}

</mosaic_0001>

<llo_original>
// kernel: sinusoidal_time_embedding.1
$region0: #{sinusoidal_time_embedding.1}
  #allocation0 [shape = 'u32[]', space=smem, size = 0x4, offset = 0x4, fixed_abs, tag = 'smem constant byte address 0x4 - core index']
  #allocation1 [shape = 'u32[72,128]{1,0:T(1,128)}', space=vmem, size = 0x9000, scoped, tag = 'internal scratch']
  %s0 = inlined_call_operand.vmem [shape: f32[64,1], index: 0, kind: input, shape index: {}]
  %s1 = inlined_call_operand.vmem [shape: f32[1,32], index: 1, kind: input, shape index: {}]
  %s2 = inlined_call_operand.vmem [shape: f32[1,32], index: 2, kind: input, shape index: {}]
  %s3 = inlined_call_operand.vmem [shape: f32[32,128], index: 3, kind: input, shape index: {}]
  %s4 = inlined_call_operand.vmem [shape: f32[1,128], index: 4, kind: input, shape index: {}]
  %s5 = inlined_call_operand.hbm [shape: f32[128,128], index: 5, kind: input, shape index: {}]
  %s6 = inlined_call_operand.vmem [shape: f32[1,128], index: 6, kind: input, shape index: {}]
  %s7 = inlined_call_operand.hbm [shape: f32[64,128], index: 7, kind: output, shape index: {}]
  %s8 = sld [smem:[#allocation0]]
  $region65: #{sinusoidal_time_embedding.1} parent=0
    _
  %s10 = ssub.s32 1, %s8
  %s11 = scalar_select 0, %s10, %s8
  $region1: #{sinusoidal_time_embedding.1} parent=0
    #allocation2 [shape = 'u8[65536]{0}', space=vmem, size = 0x10000, scoped, tag = 'input window, operand 5, single buffered']
    #allocation3 [shape = 's32[2]{0}', space=sflag, size = 0x8, scoped, tag = 'scoped memory for sinusoidal_time_embedding.1']
    #allocation4 [shape = 's32[2]{0}', space=sflag, size = 0x8, scoped, tag = 'scoped memory for sinusoidal_time_embedding.1']
    #allocation5 [shape = 'u8[32768]{0}', space=vmem, size = 0x8000, scoped, tag = 'output window, operand 0']
    %12 = vsyncpa [#allocation3], 0
    %13 = vsyncpa [#allocation4], 0
    %s14 = scalar_lea.sflag [#allocation4], 1
    %15 = vsyncpa %s14, 0
    loop: start=0, step=1, limit=4
    $region2: #{sinusoidal_time_embedding.1} parent=1 // loop_pre_header
      _
    $region3: #{sinusoidal_time_embedding.1} parent=1 // loop_header
      %s17 = sphi 0, %s21
      %p18 = scmp.ge.s32.totalorder %s17, 4
      %s27 = sphi 0, %s29
      %s30 = sphi 0, %s27
      %s31 = sphi 0, %s30
      %s47 = sphi 0, %s31
      %s51 = sphi 0, %s51
      %s53 = sphi 0, %s51
      %s54 = sphi 0, %s53
      %s68 = sphi 0, %s54
      %s72 = sphi 0, %s72
      %s74 = sphi 0, %s72
      %s75 = sphi 0, %s74
      %s89 = sphi 0, %s75
      %s93 = sphi 0, %s93
      %s95 = sphi 0, %s93
      %s96 = sphi 0, %s95
      %s110 = sphi 0, %s96
      %s114 = sphi 0, %s114
      %s116 = sphi 0, %s114
      %s117 = sphi 0, %s116
      %s131 = sphi 0, %s117
      %s135 = sphi 0, %s135
      %s137 = sphi 0, %s135
      %s138 = sphi 0, %s137
      %s152 = sphi 0, %s138
      %s156 = sphi 0, %s156
      %s158 = sphi 0, %s156
      %s159 = sphi 0, %s158
      %s173 = sphi 0, %s159
      %s179 = sphi 0, %s181
      %s182 = sphi 0, %s179
      %s183 = sphi 0, %s182
      %s199 = sphi 0, %s183
    $region4: #{sinusoidal_time_embedding.1} parent=1 // loop_header_branch
      %20 = sbr.rel (%p18) target = $region8
    $region5: #{sinusoidal_time_embedding.1} parent=1 // loop_body
      %s22 = ssub.s32 %s17, 1
      %s23 = ssub.s32 %s17, 2
      %s24 = sadd.s32 %s17, 1
      %s25 = ssub.s32 %s17, %s24
      %p26 = scmp.eq.s32.totalorder %s25, 0
      %s28 = sadd.s32 %s27, 1
      %s29 = scalar_select %p26, %s27, %s28
      %p32 = pneg %p26
      %p33 = scmp.eq.s32.totalorder %s17, 1
      %p34 = por %p32, %p33
      %p35 = scmp.ne.s32.totalorder %s27, %s30
      %p36 = scmp.eq.s32.totalorder %s17, 0
      %p37 = por %p35, %p36
      %p38 = scmp.ne.s32.totalorder %s27, %s30
      %p39 = scmp.eq.s32.totalorder %s22, 1
      %p40 = por %p38, %p39
      %p41 = scmp.ne.s32.totalorder %s30, %s31
      %p42 = scmp.eq.s32.totalorder %s22, 0
      %p43 = por %p41, %p42
      %p44 = scmp.ne.s32.totalorder %s30, %s31
      %p45 = scmp.eq.s32.totalorder %s23, 1
      %p46 = por %p44, %p45
      %p48 = scmp.ne.s32.totalorder %s31, %s47
      %p49 = scmp.eq.s32.totalorder %s23, 0
      %p50 = por %p48, %p49
      %s52 = sadd.s32 %s51, 1
      %p55 = scmp.eq.s32.totalorder %s17, 1
      %p56 = scmp.ne.s32.totalorder %s51, %s53
      %p57 = scmp.eq.s32.totalorder %s17, 0
      %p58 = por %p56, %p57
      %p59 = scmp.ne.s32.totalorder %s51, %s53
      %p60 = scmp.eq.s32.totalorder %s22, 1
      %p61 = por %p59, %p60
      %p62 = scmp.ne.s32.totalorder %s53, %s54
      %p63 = scmp.eq.s32.totalorder %s22, 0
      %p64 = por %p62, %p63
      %p65 = scmp.ne.s32.totalorder %s53, %s54
      %p66 = scmp.eq.s32.totalorder %s23, 1
      %p67 = por %p65, %p66
      %p69 = scmp.ne.s32.totalorder %s54, %s68
      %p70 = scmp.eq.s32.totalorder %s23, 0
      %p71 = por %p69, %p70
      %s73 = sadd.s32 %s72, 1
      %p76 = scmp.eq.s32.totalorder %s17, 1
      %p77 = scmp.ne.s32.totalorder %s72, %s74
      %p78 = scmp.eq.s32.totalorder %s17, 0
      %p79 = por %p77, %p78
      %p80 = scmp.ne.s32.totalorder %s72, %s74
      %p81 = scmp.eq.s32.totalorder %s22, 1
      %p82 = por %p80, %p81
      %p83 = scmp.ne.s32.totalorder %s74, %s75
      %p84 = scmp.eq.s32.totalorder %s22, 0
      %p85 = por %p83, %p84
      %p86 = scmp.ne.s32.totalorder %s74, %s75
      %p87 = scmp.eq.s32.totalorder %s23, 1
      %p88 = por %p86, %p87
      %p90 = scmp.ne.s32.totalorder %s75, %s89
      %p91 = scmp.eq.s32.totalorder %s23, 0
      %p92 = por %p90, %p91
      %s94 = sadd.s32 %s93, 1
      %p97 = scmp.eq.s32.totalorder %s17, 1
      %p98 = scmp.ne.s32.totalorder %s93, %s95
      %p99 = scmp.eq.s32.totalorder %s17, 0
      %p100 = por %p98, %p99
      %p101 = scmp.ne.s32.totalorder %s93, %s95
      %p102 = scmp.eq.s32.totalorder %s22, 1
      %p103 = por %p101, %p102
      %p104 = scmp.ne.s32.totalorder %s95, %s96
      %p105 = scmp.eq.s32.totalorder %s22, 0
      %p106 = por %p104, %p105
      %p107 = scmp.ne.s32.totalorder %s95, %s96
      %p108 = scmp.eq.s32.totalorder %s23, 1
      %p109 = por %p107, %p108
      %p111 = scmp.ne.s32.totalorder %s96, %s110
      %p112 = scmp.eq.s32.totalorder %s23, 0
      %p113 = por %p111, %p112
      %s115 = sadd.s32 %s114, 1
      %p118 = scmp.eq.s32.totalorder %s17, 1
      %p119 = scmp.ne.s32.totalorder %s114, %s116
      %p120 = scmp.eq.s32.totalorder %s17, 0
      %p121 = por %p119, %p120
      %p122 = scmp.ne.s32.totalorder %s114, %s116
      %p123 = scmp.eq.s32.totalorder %s22, 1
      %p124 = por %p122, %p123
      %p125 = scmp.ne.s32.totalorder %s116, %s117
      %p126 = scmp.eq.s32.totalorder %s22, 0
      %p127 = por %p125, %p126
      %p128 = scmp.ne.s32.totalorder %s116, %s117
      %p129 = scmp.eq.s32.totalorder %s23, 1
      %p130 = por %p128, %p129
      %p132 = scmp.ne.s32.totalorder %s117, %s131
      %p133 = scmp.eq.s32.totalorder %s23, 0
      %p134 = por %p132, %p133
      %s136 = sadd.s32 %s135, 1
      %p139 = scmp.eq.s32.totalorder %s17, 1
      %p140 = scmp.ne.s32.totalorder %s135, %s137
      %p141 = scmp.eq.s32.totalorder %s17, 0
      %p142 = por %p140, %p141
      %p143 = scmp.ne.s32.totalorder %s135, %s137
      %p144 = scmp.eq.s32.totalorder %s22, 1
      %p145 = por %p143, %p144
      %p146 = scmp.ne.s32.totalorder %s137, %s138
      %p147 = scmp.eq.s32.totalorder %s22, 0
      %p148 = por %p146, %p147
      %p149 = scmp.ne.s32.totalorder %s137, %s138
      %p150 = scmp.eq.s32.totalorder %s23, 1
      %p151 = por %p149, %p150
      %p153 = scmp.ne.s32.totalorder %s138, %s152
      %p154 = scmp.eq.s32.totalorder %s23, 0
      %p155 = por %p153, %p154
      %s157 = sadd.s32 %s156, 1
      %p160 = scmp.eq.s32.totalorder %s17, 1
      %p161 = scmp.ne.s32.totalorder %s156, %s158
      %p162 = scmp.eq.s32.totalorder %s17, 0
      %p163 = por %p161, %p162
      %p164 = scmp.ne.s32.totalorder %s156, %s158
      %p165 = scmp.eq.s32.totalorder %s22, 1
      %p166 = por %p164, %p165
      %p167 = scmp.ne.s32.totalorder %s158, %s159
      %p168 = scmp.eq.s32.totalorder %s22, 0
      %p169 = por %p167, %p168
      %p170 = scmp.ne.s32.totalorder %s158, %s159
      %p171 = scmp.eq.s32.totalorder %s23, 1
      %p172 = por %p170, %p171
      %p174 = scmp.ne.s32.totalorder %s159, %s173
      %p175 = scmp.eq.s32.totalorder %s23, 0
      %p176 = por %p174, %p175
      %s177 = ssub.s32 %s17, %s24
      %p178 = scmp.eq.s32.totalorder %s177, 0
      %s180 = sadd.s32 %s179, 1
      %s181 = scalar_select %p178, %s179, %s180
      %p184 = pneg %p178
      %p185 = scmp.eq.s32.totalorder %s17, 1
      %p186 = por %p184, %p185
      %p187 = scmp.ne.s32.totalorder %s179, %s182
      %p188 = scmp.eq.s32.totalorder %s17, 0
      %p189 = por %p187, %p188
      %p190 = scmp.ne.s32.totalorder %s179, %s182
      %p191 = scmp.eq.s32.totalorder %s22, 1
      %p192 = por %p190, %p191
      %p193 = scmp.ne.s32.totalorder %s182, %s183
      %p194 = scmp.eq.s32.totalorder %s22, 0
      %p195 = por %p193, %p194
      %p196 = scmp.ne.s32.totalorder %s182, %s183
      %p197 = scmp.eq.s32.totalorder %s23, 1
      %p198 = por %p196, %p197
      %p200 = scmp.ne.s32.totalorder %s183, %s199
      %p201 = scmp.eq.s32.totalorder %s23, 0
      %p202 = por %p200, %p201
      %p203 = scmp.le.s32.totalorder 1, %s17
      %p204 = scmp.lt.s32.totalorder %s17, 3
      %p205 = pnand %p203, %p204
      %p206 = pneg %p205
      // Predicated region
      $region9: #{sinusoidal_time_embedding.1} parent=5 // pred_check
        _
      $region10: #{sinusoidal_time_embedding.1} parent=5 // pred_check_branch
        %208 = sbr.rel (%p205) target = $region12
      $region11: #{sinusoidal_time_embedding.1} parent=5 // pred_region
        %s209 = ssub.s32 %s17, 1
        // Predicated region
        $region13: #{sinusoidal_time_embedding.1} parent=11 // pred_check
          %p210 = pneg %p64
        $region14: #{sinusoidal_time_embedding.1} parent=11 // pred_check_branch
          %212 = sbr.rel (%p210) target = $region16
        $region15: #{sinusoidal_time_embedding.1} parent=11 // pred_region
          _
        $region16: #{sinusoidal_time_embedding.1} parent=11 // pred_fallthru
          _
        // Predicated region
        $region17: #{sinusoidal_time_embedding.1} parent=11 // pred_check
          %p213 = pneg %p85
        $region18: #{sinusoidal_time_embedding.1} parent=11 // pred_check_branch
          %215 = sbr.rel (%p213) target = $region20
        $region19: #{sinusoidal_time_embedding.1} parent=11 // pred_region
          _
        $region20: #{sinusoidal_time_embedding.1} parent=11 // pred_fallthru
          _
        // Predicated region
        $region21: #{sinusoidal_time_embedding.1} parent=11 // pred_check
          %p216 = pneg %p106
        $region22: #{sinusoidal_time_embedding.1} parent=11 // pred_check_branch
          %218 = sbr.rel (%p216) target = $region24
        $region23: #{sinusoidal_time_embedding.1} parent=11 // pred_region
          _
        $region24: #{sinusoidal_time_embedding.1} parent=11 // pred_fallthru
          _
        // Predicated region
        $region25: #{sinusoidal_time_embedding.1} parent=11 // pred_check
          %p219 = pneg %p127
        $region26: #{sinusoidal_time_embedding.1} parent=11 // pred_check_branch
          %221 = sbr.rel (%p219) target = $region28
        $region27: #{sinusoidal_time_embedding.1} parent=11 // pred_region
          _
        $region28: #{sinusoidal_time_embedding.1} parent=11 // pred_fallthru
          _
        // Predicated region
        $region29: #{sinusoidal_time_embedding.1} parent=11 // pred_check
          %p222 = pneg %p148
        $region30: #{sinusoidal_time_embedding.1} parent=11 // pred_check_branch
          %224 = sbr.rel (%p222) target = $region32
        $region31: #{sinusoidal_time_embedding.1} parent=11 // pred_region
          %226 = vsyncadd [#allocation3], 0
          %s227 = sshll.u32 %s5, 4
          %s228 = int_to_ptr.hbm [resolvable:$true] %s227
          %s229 = sshll.u32 [#allocation2], 4
          %s230 = int_to_ptr.vmem [resolvable:$true] %s229
          %235 = dma.hbm_to_vmem [thread:$0]  %s228, 2048, %s230, [#allocation3], 128, 128, 8
        $region32: #{sinusoidal_time_embedding.1} parent=11 // pred_fallthru
          _
        // Predicated region
        $region33: #{sinusoidal_time_embedding.1} parent=11 // pred_check
          %p236 = pneg %p169
        $region34: #{sinusoidal_time_embedding.1} parent=11 // pred_check_branch
          %238 = sbr.rel (%p236) target = $region36
        $region35: #{sinusoidal_time_embedding.1} parent=11 // pred_region
          _
        $region36: #{sinusoidal_time_embedding.1} parent=11 // pred_fallthru
          _
      $region12: #{sinusoidal_time_embedding.1} parent=5 // pred_fallthru
        _
      %p239 = scmp.lt.s32.totalorder %s17, 2
      // Predicated region
      $region37: #{sinusoidal_time_embedding.1} parent=5 // pred_check
        %p240 = pneg %p239
      $region38: #{sinusoidal_time_embedding.1} parent=5 // pred_check_branch
        %242 = sbr.rel (%p240) target = $region40
      $region39: #{sinusoidal_time_embedding.1} parent=5 // pred_region
        // Predicated region
        $region41: #{sinusoidal_time_embedding.1} parent=39 // pred_check
          %p243 = pneg %p37
        $region42: #{sinusoidal_time_embedding.1} parent=39 // pred_check_branch
          %245 = sbr.rel (%p243) target = $region44
        $region43: #{sinusoidal_time_embedding.1} parent=39 // pred_region
          %s246 = smul.u32 4, %s17
          %p247 = scmp.lt.s32.totalorder %s246, 7
          %s248 = scalar_select %p247, %s246, 7
          %s249 = smul.addr %s248, 8
          %s250 = scalar_lea.vmem %s0, %s249
          %s251 = smul.u32 4, %s17
        $region44: #{sinusoidal_time_embedding.1} parent=39 // pred_fallthru
          _
      $region40: #{sinusoidal_time_embedding.1} parent=5 // pred_fallthru
        _
      %p252 = scmp.le.s32.totalorder 1, %s17
      %p253 = scmp.lt.s32.totalorder %s17, 3
      %p254 = pnand %p252, %p253
      %p255 = pneg %p254
      // Predicated region
      $region45: #{sinusoidal_time_embedding.1} parent=5 // pred_check
        _
      $region46: #{sinusoidal_time_embedding.1} parent=5 // pred_check_branch
        %257 = sbr.rel (%p254) target = $region48
      $region47: #{sinusoidal_time_embedding.1} parent=5 // pred_region
        %s258 = ssub.s32 %s17, 1
        // Predicated region
        $region49: #{sinusoidal_time_embedding.1} parent=47 // pred_check
          %p259 = pneg %p148
        $region50: #{sinusoidal_time_embedding.1} parent=47 // pred_check_branch
          %261 = sbr.rel (%p259) target = $region52
        $region51: #{sinusoidal_time_embedding.1} parent=47 // pred_region
          %263 = dma.done [#allocation3], 2048
        $region52: #{sinusoidal_time_embedding.1} parent=47 // pred_fallthru
          _
        %s264 = smul.u32 4, %s22
        %p265 = scmp.lt.s32.totalorder %s264, 7
        %s266 = scalar_select %p265, %s264, 7
        %s267 = smul.addr %s266, 8
        %s268 = scalar_lea.vmem %s0, %s267
        %p269 = pneg %p43
        %p270 = pneg %p40
        %p271 = pneg %p64
        %p272 = pneg %p61
        %p273 = pneg %p85
        %p274 = pneg %p82
        %p275 = pneg %p106
        %p276 = pneg %p103
        %p277 = pneg %p127
        %p278 = pneg %p124
        %p279 = pneg %p148
        %p280 = pneg %p145
        %p281 = pneg %p169
        %p282 = pneg %p166
        %p283 = pneg %p195
        %p284 = pneg %p192
        %s285 = sand.u32 %s182, 1
        %s286 = scalar_lea.sflag [#allocation4], %s285
        %s287 = sand.u32 %s182, 1
        %s288 = smul.addr %s287, 32
        %s289 = scalar_lea.vmem [#allocation5], %s288
        %s290 = smul.u32 4, %s22
        %p291 = scmp.lt.s32.totalorder %s290, 7
        %s292 = scalar_select %p291, %s290, 7
        %s293 = smul.addr %s292, 8
        %s294 = scalar_lea.vmem %s0, %s293
        %s295 = smul.u32 4, %s22
        %s296 = smul.u32 4, %s22
        %v297 = vld [vmem:[%s294] sm:$0xff]
        %v298 = vld [vmem:[%s294 + $0x8] sm:$0xff]
        %v299 = vld [vmem:[%s294 + $0x10] sm:$0xff]
        %v300 = vld [vmem:[%s294 + $0x18] sm:$0xff]
        %v301 = vld [vmem:[%s1] sm:$0x1]
        %303 = vset.pattern.permute.xlu0 0
        %304 = vperm.xlu0 %303, %v297
        %v305 = vpop.permute.xlu0 %304
        %308 = vset.pattern.permute.xlu0 0
        %309 = vperm.xlu0 %308, %v298
        %v310 = vpop.permute.xlu0 %309
        %313 = vset.pattern.permute.xlu0 0
        %314 = vperm.xlu0 %313, %v299
        %v315 = vpop.permute.xlu0 %314
        %318 = vset.pattern.permute.xlu0 0
        %319 = vperm.xlu0 %318, %v300
        %v320 = vpop.permute.xlu0 %319
        %v323 = vperm.slane %v301, 0
        %v325 = vmul.f32 %v305, %v323
        %v326 = vmul.f32 %v310, %v323
        %v327 = vmul.f32 %v315, %v323
        %v328 = vmul.f32 %v320, %v323
        %v329 = vld [vmem:[%s2] sm:$0x1]
        %v331 = vperm.slane %v329, 0
        %v333 = vadd.f32 %v325, %v331
        %v334 = vadd.f32 %v326, %v331
        %v335 = vadd.f32 %v327, %v331
        %v336 = vadd.f32 %v328, %v331
        %v337 = vand.u32 2147483647, %v333
        %vm338 = vcmp.le.f32.partialorder %v337, 0.7853982
        %vm339 = vcmp.lt.s32.totalorder %v333, 0
        %v340 = vand.u32 %v333, 2139095040
        %v341 = vshrl.u32 %v340, 23
        %v342 = vsub.s32 %v341, 127
        %v343 = vand.u32 2147483647, %v333
        %v344 = vand.u32 %v343, 8388607
        %v345 = vor.u32 %v344, 8388608
        %v346 = vsub.s32 0, %v345
        %v347 = vadd.s32 %v342, 1
        %vm348 = vcmp.gt.s32.totalorder %v347, 0
        %v349 = vsel %vm348, %v347, 0
        %v350 = vshrl.u32 %v349, 5
        %v351 = vand.u32 %v349, 31
        %v352 = vsub.s32 32, %v351
        %v353 = vshrl.u32 683565275, %v352
        %v354 = vshll.u32 683565275, %v351
        %v355 = vshrl.u32 2475754826, %v352
        %v356 = vor.u32 %v354, %v355
        %v357 = vshll.u32 2475754826, %v351
        %v358 = vshrl.u32 2131351028, %v352
        %v359 = vor.u32 %v357, %v358
        %v360 = vshll.u32 2131351028, %v351
        %v361 = vshrl.u32 2102212464, %v352
        %v362 = vor.u32 %v360, %v361
        %v363 = vshll.u32 2102212464, %v351
        %v364 = vshrl.u32 920167782, %v352
        %v365 = vor.u32 %v363, %v364
        %v366 = vshll.u32 920167782, %v351
        %v367 = vshrl.u32 1326507024, %v352
        %v368 = vor.u32 %v366, %v367
        %vm369 = vcmp.lt.s32.totalorder %v350, 1
        %vm370 = vcmp.lt.s32.totalorder %v350, 2
        %vm371 = vcmp.lt.s32.totalorder %v350, 3
        %vm372 = vcmp.lt.s32.totalorder %v350, 4
        %v373 = vsel %vm369, %v353, %v356
        %v374 = vsel %vm372, %v362, 2102212464
        %v375 = vsel %vm371, %v359, %v374
        %v376 = vsel %vm370, %v373, %v375
        %v377 = vsel %vm369, %v356, %v359
        %v378 = vsel %vm372, %v365, 920167782
        %v379 = vsel %vm371, %v362, %v378
        %v380 = vsel %vm370, %v377, %v379
        %v381 = vsel %vm369, %v359, %v362
        %v382 = vsel %vm372, %v368, 1326507024
        %v383 = vsel %vm371, %v365, %v382
        %v384 = vsel %vm370, %v381, %v383
        %v385 = vshll.u32 %v345, 8
        %v386 = vand.u32 %v385, 65535
        %v387 = vshrl.u32 %v385, 16
        %v388 = vand.u32 %v384, 65535
        %v389 = vshrl.u32 %v384, 16
        %v390 = vmul.u32 %v386, %v388
        %v391 = vmul.u32 %v386, %v389
        %v392 = vmul.u32 %v387, %v388
        %v393 = vmul.u32 %v387, %v389
        %v394 = vshll.u32 %v391, 16
        %v395 = vshrl.u32 %v391, 16
        %v396 = vshll.u32 %v392, 16
        %v397 = vshrl.u32 %v392, 16
        %vm398 = vc.u32 %v390, %v394
        %v399 = vsel %vm398, 1, 0
        %v400 = vadd.s32 %v390, %v394
        %v401 = vadd.s32 %v393, %v399
        %vm402 = vc.u32 %v400, %v396
        %v403 = vsel %vm402, 1, 0
        %v404 = vadd.s32 %v400, %v396
        %v405 = vadd.s32 %v401, %v403
        %v406 = vadd.s32 %v405, %v395
        %v407 = vadd.s32 %v406, %v397
        %v408 = vand.u32 %v385, 65535
        %v409 = vshrl.u32 %v385, 16
        %v410 = vand.u32 %v380, 65535
        %v411 = vshrl.u32 %v380, 16
        %v412 = vmul.u32 %v408, %v410
        %v413 = vmul.u32 %v408, %v411
        %v414 = vmul.u32 %v409, %v410
        %v415 = vmul.u32 %v409, %v411
        %v416 = vshll.u32 %v413, 16
        %v417 = vshrl.u32 %v413, 16
        %v418 = vshll.u32 %v414, 16
        %v419 = vshrl.u32 %v414, 16
        %vm420 = vc.u32 %v412, %v416
        %v421 = vsel %vm420, 1, 0
        %v422 = vadd.s32 %v412, %v416
        %v423 = vadd.s32 %v415, %v421
        %vm424 = vc.u32 %v422, %v418
        %v425 = vsel %vm424, 1, 0
        %v426 = vadd.s32 %v422, %v418
        %v427 = vadd.s32 %v423, %v425
        %v428 = vadd.s32 %v427, %v417
        %v429 = vadd.s32 %v428, %v419
        %v430 = vmul.u32 %v385, %v376
        %v431 = vadd.s32 %v407, %v426
        %vm432 = vc.u32 %v407, %v426
        %v433 = vadd.s32 %v429, 1
        %v434 = vsel %vm432, %v433, %v429
        %v435 = vadd.s32 %v430, %v434
        %v436 = vadd.s32 %v435, 536870912
        %v437 = vshrl.u32 %v436, 30
        %v438 = vshll.u32 %v437, 30
        %v439 = vsub.s32 %v435, %v438
        %vm440 = vcmp.lt.s32.totalorder %v439, 0
        %v441 = vsub.s32 0, %v439
        %v442 = vsel %vm440, %v441, %v439
        %v443 = vclz %v442
        %v444 = vsub.s32 %v443, 2
        %vm445 = vcmp.gt.s32.totalorder 0, %v444
        %v446 = vsel %vm445, 0, %v444
        %v447 = vsub.s32 32, %v446
        %v448 = vshll.u32 %v439, %v446
        %v449 = vshrl.u32 %v431, %v447
        %v450 = vor.u32 %v448, %v449
        %v451 = vsub.s32 4294967266, %v446
        %v452 = vadd.s32 %v451, 127
        %v453 = vshll.u32 %v452, 23
        %v454 = vor.u32 4788187, %v453
        %v455 = vand.u32 2147483647, %v454
        %v457 = vcvt.s32.f32 %v450
        %v458 = vmul.f32 %v457, %v455
        %v459 = vxor.u32 %v458, 2147483648
        %v460 = vsel %vm339, %v459, %v458
        %v461 = vsub.s32 4, %v437
        %v462 = vsel %vm339, %v461, %v437
        %v463 = vsel %vm338, %v333, %v460
        %v464 = vsel %vm338, 0, %v462
        %v465 = vmul.f32 %v463, %v463
        %v466 = vmul.f32 %v465, -0.001358992
        %v467 = vadd.f32 %v466, 0.041655596
        %v468 = vmul.f32 %v465, %v467
        %v469 = vadd.f32 %v468, -0.4999988
        %v470 = vmul.f32 %v465, %v469
        %v471 = vadd.f32 1.0, %v470
        %v472 = vmul.f32 %v463, %v463
        %v473 = vmul.f32 %v472, -0.00019511016
        %v474 = vadd.f32 %v473, 0.008332121
        %v475 = vmul.f32 %v472, %v474
        %v476 = vadd.f32 %v475, -0.16666654
        %v477 = vmul.f32 %v472, %v476
        %v478 = vadd.f32 %v477, 1.0
        %v479 = vmul.f32 %v478, %v463
        %vm480 = vweird.f32 %v333
        %v481 = vadd.s32 %v464, 3
        %v482 = vand.u32 %v481, 3
        %vm483 = vcmp.lt.s32.totalorder %v482, 2
        %vm484 = vcmp.eq.s32.totalorder %v482, 0
        %v485 = vxor.u32 %v479, 2147483648
        %v486 = vsel %vm484, %v471, %v485
        %vm487 = vcmp.eq.s32.totalorder %v482, 2
        %v488 = vxor.u32 %v471, 2147483648
        %v489 = vsel %vm487, %v488, %v479
        %v490 = vsel %vm483, %v486, %v489
        %v491 = vsel %vm480, nan, %v490
        %v492 = vand.u32 2147483647, %v334
        %vm493 = vcmp.le.f32.partialorder %v492, 0.7853982
        %vm494 = vcmp.lt.s32.totalorder %v334, 0
        %v495 = vand.u32 %v334, 2139095040
        %v496 = vshrl.u32 %v495, 23
        %v497 = vsub.s32 %v496, 127
        %v498 = vand.u32 2147483647, %v334
        %v499 = vand.u32 %v498, 8388607
        %v500 = vor.u32 %v499, 8388608
        %v501 = vsub.s32 0, %v500
        %v502 = vadd.s32 %v497, 1
        %vm503 = vcmp.gt.s32.totalorder %v502, 0
        %v504 = vsel %vm503, %v502, 0
        %v505 = vshrl.u32 %v504, 5
        %v506 = vand.u32 %v504, 31
        %v507 = vsub.s32 32, %v506
        %v508 = vshrl.u32 683565275, %v507
        %v509 = vshll.u32 683565275, %v506
        %v510 = vshrl.u32 2475754826, %v507
        %v511 = vor.u32 %v509, %v510
        %v512 = vshll.u32 2475754826, %v506
        %v513 = vshrl.u32 2131351028, %v507
        %v514 = vor.u32 %v512, %v513
        %v515 = vshll.u32 2131351028, %v506
        %v516 = vshrl.u32 2102212464, %v507
        %v517 = vor.u32 %v515, %v516
        %v518 = vshll.u32 2102212464, %v506
        %v519 = vshrl.u32 920167782, %v507
        %v520 = vor.u32 %v518, %v519
        %v521 = vshll.u32 920167782, %v506
        %v522 = vshrl.u32 1326507024, %v507
        %v523 = vor.u32 %v521, %v522
        %vm524 = vcmp.lt.s32.totalorder %v505, 1
        %vm525 = vcmp.lt.s32.totalorder %v505, 2
        %vm526 = vcmp.lt.s32.totalorder %v505, 3
        %vm527 = vcmp.lt.s32.totalorder %v505, 4
        %v528 = vsel %vm524, %v508, %v511
        %v529 = vsel %vm527, %v517, 2102212464
        %v530 = vsel %vm526, %v514, %v529
        %v531 = vsel %vm525, %v528, %v530
        %v532 = vsel %vm524, %v511, %v514
        %v533 = vsel %vm527, %v520, 920167782
        %v534 = vsel %vm526, %v517, %v533
        %v535 = vsel %vm525, %v532, %v534
        %v536 = vsel %vm524, %v514, %v517
        %v537 = vsel %vm527, %v523, 1326507024
        %v538 = vsel %vm526, %v520, %v537
        %v539 = vsel %vm525, %v536, %v538
        %v540 = vshll.u32 %v500, 8
        %v541 = vand.u32 %v540, 65535
        %v542 = vshrl.u32 %v540, 16
        %v543 = vand.u32 %v539, 65535
        %v544 = vshrl.u32 %v539, 16
        %v545 = vmul.u32 %v541, %v543
        %v546 = vmul.u32 %v541, %v544
        %v547 = vmul.u32 %v542, %v543
        %v548 = vmul.u32 %v542, %v544
        %v549 = vshll.u32 %v546, 16
        %v550 = vshrl.u32 %v546, 16
        %v551 = vshll.u32 %v547, 16
        %v552 = vshrl.u32 %v547, 16
        %vm553 = vc.u32 %v545, %v549
        %v554 = vsel %vm553, 1, 0
        %v555 = vadd.s32 %v545, %v549
        %v556 = vadd.s32 %v548, %v554
        %vm557 = vc.u32 %v555, %v551
        %v558 = vsel %vm557, 1, 0
        %v559 = vadd.s32 %v555, %v551
        %v560 = vadd.s32 %v556, %v558
        %v561 = vadd.s32 %v560, %v550
        %v562 = vadd.s32 %v561, %v552
        %v563 = vand.u32 %v540, 65535
        %v564 = vshrl.u32 %v540, 16
        %v565 = vand.u32 %v535, 65535
        %v566 = vshrl.u32 %v535, 16
        %v567 = vmul.u32 %v563, %v565
        %v568 = vmul.u32 %v563, %v566
        %v569 = vmul.u32 %v564, %v565
        %v570 = vmul.u32 %v564, %v566
        %v571 = vshll.u32 %v568, 16
        %v572 = vshrl.u32 %v568, 16
        %v573 = vshll.u32 %v569, 16
        %v574 = vshrl.u32 %v569, 16
        %vm575 = vc.u32 %v567, %v571
        %v576 = vsel %vm575, 1, 0
        %v577 = vadd.s32 %v567, %v571
        %v578 = vadd.s32 %v570, %v576
        %vm579 = vc.u32 %v577, %v573
        %v580 = vsel %vm579, 1, 0
        %v581 = vadd.s32 %v577, %v573
        %v582 = vadd.s32 %v578, %v580
        %v583 = vadd.s32 %v582, %v572
        %v584 = vadd.s32 %v583, %v574
        %v585 = vmul.u32 %v540, %v531
        %v586 = vadd.s32 %v562, %v581
        %vm587 = vc.u32 %v562, %v581
        %v588 = vadd.s32 %v584, 1
        %v589 = vsel %vm587, %v588, %v584
        %v590 = vadd.s32 %v585, %v589
        %v591 = vadd.s32 %v590, 536870912
        %v592 = vshrl.u32 %v591, 30
        %v593 = vshll.u32 %v592, 30
        %v594 = vsub.s32 %v590, %v593
        %vm595 = vcmp.lt.s32.totalorder %v594, 0
        %v596 = vsub.s32 0, %v594
        %v597 = vsel %vm595, %v596, %v594
        %v598 = vclz %v597
        %v599 = vsub.s32 %v598, 2
        %vm600 = vcmp.gt.s32.totalorder 0, %v599
        %v601 = vsel %vm600, 0, %v599
        %v602 = vsub.s32 32, %v601
        %v603 = vshll.u32 %v594, %v601
        %v604 = vshrl.u32 %v586, %v602
        %v605 = vor.u32 %v603, %v604
        %v606 = vsub.s32 4294967266, %v601
        %v607 = vadd.s32 %v606, 127
        %v608 = vshll.u32 %v607, 23
        %v609 = vor.u32 4788187, %v608
        %v610 = vand.u32 2147483647, %v609
        %v612 = vcvt.s32.f32 %v605
        %v613 = vmul.f32 %v612, %v610
        %v614 = vxor.u32 %v613, 2147483648
        %v615 = vsel %vm494, %v614, %v613
        %v616 = vsub.s32 4, %v592
        %v617 = vsel %vm494, %v616, %v592
        %v618 = vsel %vm493, %v334, %v615
        %v619 = vsel %vm493, 0, %v617
        %v620 = vmul.f32 %v618, %v618
        %v621 = vmul.f32 %v620, -0.001358992
        %v622 = vadd.f32 %v621, 0.041655596
        %v623 = vmul.f32 %v620, %v622
        %v624 = vadd.f32 %v623, -0.4999988
        %v625 = vmul.f32 %v620, %v624
        %v626 = vadd.f32 1.0, %v625
        %v627 = vmul.f32 %v618, %v618
        %v628 = vmul.f32 %v627, -0.00019511016
        %v629 = vadd.f32 %v628, 0.008332121
        %v630 = vmul.f32 %v627, %v629
        %v631 = vadd.f32 %v630, -0.16666654
        %v632 = vmul.f32 %v627, %v631
        %v633 = vadd.f32 %v632, 1.0
        %v634 = vmul.f32 %v633, %v618
        %vm635 = vweird.f32 %v334
        %v636 = vadd.s32 %v619, 3
        %v637 = vand.u32 %v636, 3
        %vm638 = vcmp.lt.s32.totalorder %v637, 2
        %vm639 = vcmp.eq.s32.totalorder %v637, 0
        %v640 = vxor.u32 %v634, 2147483648
        %v641 = vsel %vm639, %v626, %v640
        %vm642 = vcmp.eq.s32.totalorder %v637, 2
        %v643 = vxor.u32 %v626, 2147483648
        %v644 = vsel %vm642, %v643, %v634
        %v645 = vsel %vm638, %v641, %v644
        %v646 = vsel %vm635, nan, %v645
        %v647 = vand.u32 2147483647, %v335
        %vm648 = vcmp.le.f32.partialorder %v647, 0.7853982
        %vm649 = vcmp.lt.s32.totalorder %v335, 0
        %v650 = vand.u32 %v335, 2139095040
        %v651 = vshrl.u32 %v650, 23
        %v652 = vsub.s32 %v651, 127
        %v653 = vand.u32 2147483647, %v335
        %v654 = vand.u32 %v653, 8388607
        %v655 = vor.u32 %v654, 8388608
        %v656 = vsub.s32 0, %v655
        %v657 = vadd.s32 %v652, 1
        %vm658 = vcmp.gt.s32.totalorder %v657, 0
        %v659 = vsel %vm658, %v657, 0
        %v660 = vshrl.u32 %v659, 5
        %v661 = vand.u32 %v659, 31
        %v662 = vsub.s32 32, %v661
        %v663 = vshrl.u32 683565275, %v662
        %v664 = vshll.u32 683565275, %v661
        %v665 = vshrl.u32 2475754826, %v662
        %v666 = vor.u32 %v664, %v665
        %v667 = vshll.u32 2475754826, %v661
        %v668 = vshrl.u32 2131351028, %v662
        %v669 = vor.u32 %v667, %v668
        %v670 = vshll.u32 2131351028, %v661
        %v671 = vshrl.u32 2102212464, %v662
        %v672 = vor.u32 %v670, %v671
        %v673 = vshll.u32 2102212464, %v661
        %v674 = vshrl.u32 920167782, %v662
        %v675 = vor.u32 %v673, %v674
        %v676 = vshll.u32 920167782, %v661
        %v677 = vshrl.u32 1326507024, %v662
        %v678 = vor.u32 %v676, %v677
        %vm679 = vcmp.lt.s32.totalorder %v660, 1
        %vm680 = vcmp.lt.s32.totalorder %v660, 2
        %vm681 = vcmp.lt.s32.totalorder %v660, 3
        %vm682 = vcmp.lt.s32.totalorder %v660, 4
        %v683 = vsel %vm679, %v663, %v666
        %v684 = vsel %vm682, %v672, 2102212464
        %v685 = vsel %vm681, %v669, %v684
        %v686 = vsel %vm680, %v683, %v685
        %v687 = vsel %vm679, %v666, %v669
        %v688 = vsel %vm682, %v675, 920167782
        %v689 = vsel %vm681, %v672, %v688
        %v690 = vsel %vm680, %v687, %v689
        %v691 = vsel %vm679, %v669, %v672
        %v692 = vsel %vm682, %v678, 1326507024
        %v693 = vsel %vm681, %v675, %v692
        %v694 = vsel %vm680, %v691, %v693
        %v695 = vshll.u32 %v655, 8
        %v696 = vand.u32 %v695, 65535
        %v697 = vshrl.u32 %v695, 16
        %v698 = vand.u32 %v694, 65535
        %v699 = vshrl.u32 %v694, 16
        %v700 = vmul.u32 %v696, %v698
        %v701 = vmul.u32 %v696, %v699
        %v702 = vmul.u32 %v697, %v698
        %v703 = vmul.u32 %v697, %v699
        %v704 = vshll.u32 %v701, 16
        %v705 = vshrl.u32 %v701, 16
        %v706 = vshll.u32 %v702, 16
        %v707 = vshrl.u32 %v702, 16
        %vm708 = vc.u32 %v700, %v704
        %v709 = vsel %vm708, 1, 0
        %v710 = vadd.s32 %v700, %v704
        %v711 = vadd.s32 %v703, %v709
        %vm712 = vc.u32 %v710, %v706
        %v713 = vsel %vm712, 1, 0
        %v714 = vadd.s32 %v710, %v706
        %v715 = vadd.s32 %v711, %v713
        %v716 = vadd.s32 %v715, %v705
        %v717 = vadd.s32 %v716, %v707
        %v718 = vand.u32 %v695, 65535
        %v719 = vshrl.u32 %v695, 16
        %v720 = vand.u32 %v690, 65535
        %v721 = vshrl.u32 %v690, 16
        %v722 = vmul.u32 %v718, %v720
        %v723 = vmul.u32 %v718, %v721
        %v724 = vmul.u32 %v719, %v720
        %v725 = vmul.u32 %v719, %v721
        %v726 = vshll.u32 %v723, 16
        %v727 = vshrl.u32 %v723, 16
        %v728 = vshll.u32 %v724, 16
        %v729 = vshrl.u32 %v724, 16
        %vm730 = vc.u32 %v722, %v726
        %v731 = vsel %vm730, 1, 0
        %v732 = vadd.s32 %v722, %v726
        %v733 = vadd.s32 %v725, %v731
        %vm734 = vc.u32 %v732, %v728
        %v735 = vsel %vm734, 1, 0
        %v736 = vadd.s32 %v732, %v728
        %v737 = vadd.s32 %v733, %v735
        %v738 = vadd.s32 %v737, %v727
        %v739 = vadd.s32 %v738, %v729
        %v740 = vmul.u32 %v695, %v686
        %v741 = vadd.s32 %v717, %v736
        %vm742 = vc.u32 %v717, %v736
        %v743 = vadd.s32 %v739, 1
        %v744 = vsel %vm742, %v743, %v739
        %v745 = vadd.s32 %v740, %v744
        %v746 = vadd.s32 %v745, 536870912
        %v747 = vshrl.u32 %v746, 30
        %v748 = vshll.u32 %v747, 30
        %v749 = vsub.s32 %v745, %v748
        %vm750 = vcmp.lt.s32.totalorder %v749, 0
        %v751 = vsub.s32 0, %v749
        %v752 = vsel %vm750, %v751, %v749
        %v753 = vclz %v752
        %v754 = vsub.s32 %v753, 2
        %vm755 = vcmp.gt.s32.totalorder 0, %v754
        %v756 = vsel %vm755, 0, %v754
        %v757 = vsub.s32 32, %v756
        %v758 = vshll.u32 %v749, %v756
        %v759 = vshrl.u32 %v741, %v757
        %v760 = vor.u32 %v758, %v759
        %v761 = vsub.s32 4294967266, %v756
        %v762 = vadd.s32 %v761, 127
        %v763 = vshll.u32 %v762, 23
        %v764 = vor.u32 4788187, %v763
        %v765 = vand.u32 2147483647, %v764
        %v767 = vcvt.s32.f32 %v760
        %v768 = vmul.f32 %v767, %v765
        %v769 = vxor.u32 %v768, 2147483648
        %v770 = vsel %vm649, %v769, %v768
        %v771 = vsub.s32 4, %v747
        %v772 = vsel %vm649, %v771, %v747
        %v773 = vsel %vm648, %v335, %v770
        %v774 = vsel %vm648, 0, %v772
        %v775 = vmul.f32 %v773, %v773
        %v776 = vmul.f32 %v775, -0.001358992
        %v777 = vadd.f32 %v776, 0.041655596
        %v778 = vmul.f32 %v775, %v777
        %v779 = vadd.f32 %v778, -0.4999988
        %v780 = vmul.f32 %v775, %v779
        %v781 = vadd.f32 1.0, %v780
        %v782 = vmul.f32 %v773, %v773
        %v783 = vmul.f32 %v782, -0.00019511016
        %v784 = vadd.f32 %v783, 0.008332121
        %v785 = vmul.f32 %v782, %v784
        %v786 = vadd.f32 %v785, -0.16666654
        %v787 = vmul.f32 %v782, %v786
        %v788 = vadd.f32 %v787, 1.0
        %v789 = vmul.f32 %v788, %v773
        %vm790 = vweird.f32 %v335
        %v791 = vadd.s32 %v774, 3
        %v792 = vand.u32 %v791, 3
        %vm793 = vcmp.lt.s32.totalorder %v792, 2
        %vm794 = vcmp.eq.s32.totalorder %v792, 0
        %v795 = vxor.u32 %v789, 2147483648
        %v796 = vsel %vm794, %v781, %v795
        %vm797 = vcmp.eq.s32.totalorder %v792, 2
        %v798 = vxor.u32 %v781, 2147483648
        %v799 = vsel %vm797, %v798, %v789
        %v800 = vsel %vm793, %v796, %v799
        %v801 = vsel %vm790, nan, %v800
        %v802 = vand.u32 2147483647, %v336
        %vm803 = vcmp.le.f32.partialorder %v802, 0.7853982
        %vm804 = vcmp.lt.s32.totalorder %v336, 0
        %v805 = vand.u32 %v336, 2139095040
        %v806 = vshrl.u32 %v805, 23
        %v807 = vsub.s32 %v806, 127
        %v808 = vand.u32 2147483647, %v336
        %v809 = vand.u32 %v808, 8388607
        %v810 = vor.u32 %v809, 8388608
        %v811 = vsub.s32 0, %v810
        %v812 = vadd.s32 %v807, 1
        %vm813 = vcmp.gt.s32.totalorder %v812, 0
        %v814 = vsel %vm813, %v812, 0
        %v815 = vshrl.u32 %v814, 5
        %v816 = vand.u32 %v814, 31
        %v817 = vsub.s32 32, %v816
        %v818 = vshrl.u32 683565275, %v817
        %v819 = vshll.u32 683565275, %v816
        %v820 = vshrl.u32 2475754826, %v817
        %v821 = vor.u32 %v819, %v820
        %v822 = vshll.u32 2475754826, %v816
        %v823 = vshrl.u32 2131351028, %v817
        %v824 = vor.u32 %v822, %v823
        %v825 = vshll.u32 2131351028, %v816
        %v826 = vshrl.u32 2102212464, %v817
        %v827 = vor.u32 %v825, %v826
        %v828 = vshll.u32 2102212464, %v816
        %v829 = vshrl.u32 920167782, %v817
        %v830 = vor.u32 %v828, %v829
        %v831 = vshll.u32 920167782, %v816
        %v832 = vshrl.u32 1326507024, %v817
        %v833 = vor.u32 %v831, %v832
        %vm834 = vcmp.lt.s32.totalorder %v815, 1
        %vm835 = vcmp.lt.s32.totalorder %v815, 2
        %vm836 = vcmp.lt.s32.totalorder %v815, 3
        %vm837 = vcmp.lt.s32.totalorder %v815, 4
        %v838 = vsel %vm834, %v818, %v821
        %v839 = vsel %vm837, %v827, 2102212464
        %v840 = vsel %vm836, %v824, %v839
        %v841 = vsel %vm835, %v838, %v840
        %v842 = vsel %vm834, %v821, %v824
        %v843 = vsel %vm837, %v830, 920167782
        %v844 = vsel %vm836, %v827, %v843
        %v845 = vsel %vm835, %v842, %v844
        %v846 = vsel %vm834, %v824, %v827
        %v847 = vsel %vm837, %v833, 1326507024
        %v848 = vsel %vm836, %v830, %v847
        %v849 = vsel %vm835, %v846, %v848
        %v850 = vshll.u32 %v810, 8
        %v851 = vand.u32 %v850, 65535
        %v852 = vshrl.u32 %v850, 16
        %v853 = vand.u32 %v849, 65535
        %v854 = vshrl.u32 %v849, 16
        %v855 = vmul.u32 %v851, %v853
        %v856 = vmul.u32 %v851, %v854
        %v857 = vmul.u32 %v852, %v853
        %v858 = vmul.u32 %v852, %v854
        %v859 = vshll.u32 %v856, 16
        %v860 = vshrl.u32 %v856, 16
        %v861 = vshll.u32 %v857, 16
        %v862 = vshrl.u32 %v857, 16
        %vm863 = vc.u32 %v855, %v859
        %v864 = vsel %vm863, 1, 0
        %v865 = vadd.s32 %v855, %v859
        %v866 = vadd.s32 %v858, %v864
        %vm867 = vc.u32 %v865, %v861
        %v868 = vsel %vm867, 1, 0
        %v869 = vadd.s32 %v865, %v861
        %v870 = vadd.s32 %v866, %v868
        %v871 = vadd.s32 %v870, %v860
        %v872 = vadd.s32 %v871, %v862
        %v873 = vand.u32 %v850, 65535
        %v874 = vshrl.u32 %v850, 16
        %v875 = vand.u32 %v845, 65535
        %v876 = vshrl.u32 %v845, 16
        %v877 = vmul.u32 %v873, %v875
        %v878 = vmul.u32 %v873, %v876
        %v879 = vmul.u32 %v874, %v875
        %v880 = vmul.u32 %v874, %v876
        %v881 = vshll.u32 %v878, 16
        %v882 = vshrl.u32 %v878, 16
        %v883 = vshll.u32 %v879, 16
        %v884 = vshrl.u32 %v879, 16
        %vm885 = vc.u32 %v877, %v881
        %v886 = vsel %vm885, 1, 0
        %v887 = vadd.s32 %v877, %v881
        %v888 = vadd.s32 %v880, %v886
        %vm889 = vc.u32 %v887, %v883
        %v890 = vsel %vm889, 1, 0
        %v891 = vadd.s32 %v887, %v883
        %v892 = vadd.s32 %v888, %v890
        %v893 = vadd.s32 %v892, %v882
        %v894 = vadd.s32 %v893, %v884
        %v895 = vmul.u32 %v850, %v841
        %v896 = vadd.s32 %v872, %v891
        %vm897 = vc.u32 %v872, %v891
        %v898 = vadd.s32 %v894, 1
        %v899 = vsel %vm897, %v898, %v894
        %v900 = vadd.s32 %v895, %v899
        %v901 = vadd.s32 %v900, 536870912
        %v902 = vshrl.u32 %v901, 30
        %v903 = vshll.u32 %v902, 30
        %v904 = vsub.s32 %v900, %v903
        %vm905 = vcmp.lt.s32.totalorder %v904, 0
        %v906 = vsub.s32 0, %v904
        %v907 = vsel %vm905, %v906, %v904
        %v908 = vclz %v907
        %v909 = vsub.s32 %v908, 2
        %vm910 = vcmp.gt.s32.totalorder 0, %v909
        %v911 = vsel %vm910, 0, %v909
        %v912 = vsub.s32 32, %v911
        %v913 = vshll.u32 %v904, %v911
        %v914 = vshrl.u32 %v896, %v912
        %v915 = vor.u32 %v913, %v914
        %v916 = vsub.s32 4294967266, %v911
        %v917 = vadd.s32 %v916, 127
        %v918 = vshll.u32 %v917, 23
        %v919 = vor.u32 4788187, %v918
        %v920 = vand.u32 2147483647, %v919
        %v922 = vcvt.s32.f32 %v915
        %v923 = vmul.f32 %v922, %v920
        %v924 = vxor.u32 %v923, 2147483648
        %v925 = vsel %vm804, %v924, %v923
        %v926 = vsub.s32 4, %v902
        %v927 = vsel %vm804, %v926, %v902
        %v928 = vsel %vm803, %v336, %v925
        %v929 = vsel %vm803, 0, %v927
        %v930 = vmul.f32 %v928, %v928
        %v931 = vmul.f32 %v930, -0.001358992
        %v932 = vadd.f32 %v931, 0.041655596
        %v933 = vmul.f32 %v930, %v932
        %v934 = vadd.f32 %v933, -0.4999988
        %v935 = vmul.f32 %v930, %v934
        %v936 = vadd.f32 1.0, %v935
        %v937 = vmul.f32 %v928, %v928
        %v938 = vmul.f32 %v937, -0.00019511016
        %v939 = vadd.f32 %v938, 0.008332121
        %v940 = vmul.f32 %v937, %v939
        %v941 = vadd.f32 %v940, -0.16666654
        %v942 = vmul.f32 %v937, %v941
        %v943 = vadd.f32 %v942, 1.0
        %v944 = vmul.f32 %v943, %v928
        %vm945 = vweird.f32 %v336
        %v946 = vadd.s32 %v929, 3
        %v947 = vand.u32 %v946, 3
        %vm948 = vcmp.lt.s32.totalorder %v947, 2
        %vm949 = vcmp.eq.s32.totalorder %v947, 0
        %v950 = vxor.u32 %v944, 2147483648
        %v951 = vsel %vm949, %v936, %v950
        %vm952 = vcmp.eq.s32.totalorder %v947, 2
        %v953 = vxor.u32 %v936, 2147483648
        %v954 = vsel %vm952, %v953, %v944
        %v955 = vsel %vm948, %v951, %v954
        %v956 = vsel %vm945, nan, %v955
        %v957 = vld [vmem:[%s3] sm:$0xff]
        %v958 = vld [vmem:[%s3 + $0x8] sm:$0xff]
        %v959 = vld [vmem:[%s3 + $0x10] sm:$0xff]
        %v960 = vld [vmem:[%s3 + $0x18] sm:$0xff]
        %v961 = vld [vmem:[%s4] sm:$0x1]
        %v963 = vperm.slane %v961, 0
        %vm965 = vcmask 261120
        %v967 = vsel %vm965, %v491, 0
        %v970 = vsel %vm965, %v646, 0
        %v973 = vsel %vm965, %v801, 0
        %v976 = vsel %vm965, %v956, 0
        %978 = vmatpush.msra.mxu0 0.0
        %979 = vmatpush.msra.mxu0 0.0
        %980 = vmatpush.msra.mxu0 0.0
        %981 = vmatpush.msra.mxu0 0.0
        %982 = vmatpush.msra.mxu0 0.0
        %983 = vmatpush.msra.mxu0 0.0
        %984 = vmatpush.msra.mxu0 0.0
        %985 = vmatpush.msra.mxu0 0.0
        %986 = vmatpush.msra.mxu0 0.0
        %987 = vmatpush.msra.mxu0 0.0
        %988 = vmatpush.msra.mxu0 0.0
        %989 = vmatpush.msra.mxu0 0.0
        %990 = vmatpush.msra.mxu0 %v960
        %991 = vmatpush.msra.mxu0 %v959
        %992 = vmatpush.msra.mxu0 %v958
        %993 = vmatpush.msra.mxu0 %v957
        %994 = vmatmul.f32.gmra.mxu0 %v967
        %v995 = vpop.f32.mrf.mxu0
        %v996 = vadd.f32 %v963, %v995
        %997 = vmatmul.f32.gmra.mxu0 %v970
        %v998 = vpop.f32.mrf.mxu0
        %v999 = vadd.f32 %v963, %v998
        %1000 = vmatmul.f32.gmra.mxu0 %v973
        %v1001 = vpop.f32.mrf.mxu0
        %v1002 = vadd.f32 %v963, %v1001
        %1003 = vmatmul.f32.gmra.mxu0 %v976
        %v1004 = vpop.f32.mrf.mxu0
        %v1005 = vadd.f32 %v963, %v1004
        %1006 = vdwg.mxu0
        %v1007 = vxor.u32 %v996, 2147483648
        %v1008 = vxor.u32 %v999, 2147483648
        %v1009 = vxor.u32 %v1002, 2147483648
        %v1010 = vxor.u32 %v1005, 2147483648
        %v1011 = vmul.f32 %v1007, 1.442695
        %v1012 = vpow.pop %v1011
        %v1013 = vmul.f32 %v1008, 1.442695
        %v1014 = vpow.pop %v1013
        %v1015 = vmul.f32 %v1009, 1.442695
        %v1016 = vpow.pop %v1015
        %v1017 = vmul.f32 %v1010, 1.442695
        %v1018 = vpow.pop %v1017
        %v1019 = vadd.f32 %v1012, 1.0
        %v1020 = vadd.f32 %v1014, 1.0
        %v1021 = vadd.f32 %v1016, 1.0
        %v1022 = vadd.f32 %v1018, 1.0
        %v1023 = vrcp.pop %v1019
        %v1024 = vmul.f32 %v1019, %v1023
        %v1025 = vsub.f32 1.0, %v1024
        %v1026 = vmul.f32 %v1023, %v1025
        %v1027 = vadd.f32 %v1023, %v1026
        %vm1028 = vweird.f32 %v1019
        %vm1029 = vweird.f32 %v1023
        %vm1030 = vmor %vm1028, %vm1029
        %v1031 = vsel %vm1030, %v1023, %v1027
        %v1032 = vand.u32 2147483647, %v1019
        %vm1033 = vcmp.eq.f32.partialorder %v1032, 8.507059e+37
        %v1034 = vand.u32 %v1019, 2147483648
        %v1035 = vor.u32 1.1754944e-38, %v1034
        %v1036 = vsel %vm1033, %v1035, %v1031
        %v1037 = vmul.f32 1.0, %v1036
        %v1038 = vrcp.pop %v1020
        %v1039 = vmul.f32 %v1020, %v1038
        %v1040 = vsub.f32 1.0, %v1039
        %v1041 = vmul.f32 %v1038, %v1040
        %v1042 = vadd.f32 %v1038, %v1041
        %vm1043 = vweird.f32 %v1020
        %vm1044 = vweird.f32 %v1038
        %vm1045 = vmor %vm1043, %vm1044
        %v1046 = vsel %vm1045, %v1038, %v1042
        %v1047 = vand.u32 2147483647, %v1020
        %vm1048 = vcmp.eq.f32.partialorder %v1047, 8.507059e+37
        %v1049 = vand.u32 %v1020, 2147483648
        %v1050 = vor.u32 1.1754944e-38, %v1049
        %v1051 = vsel %vm1048, %v1050, %v1046
        %v1052 = vmul.f32 1.0, %v1051
        %v1053 = vrcp.pop %v1021
        %v1054 = vmul.f32 %v1021, %v1053
        %v1055 = vsub.f32 1.0, %v1054
        %v1056 = vmul.f32 %v1053, %v1055
        %v1057 = vadd.f32 %v1053, %v1056
        %vm1058 = vweird.f32 %v1021
        %vm1059 = vweird.f32 %v1053
        %vm1060 = vmor %vm1058, %vm1059
        %v1061 = vsel %vm1060, %v1053, %v1057
        %v1062 = vand.u32 2147483647, %v1021
        %vm1063 = vcmp.eq.f32.partialorder %v1062, 8.507059e+37
        %v1064 = vand.u32 %v1021, 2147483648
        %v1065 = vor.u32 1.1754944e-38, %v1064
        %v1066 = vsel %vm1063, %v1065, %v1061
        %v1067 = vmul.f32 1.0, %v1066
        %v1068 = vrcp.pop %v1022
        %v1069 = vmul.f32 %v1022, %v1068
        %v1070 = vsub.f32 1.0, %v1069
        %v1071 = vmul.f32 %v1068, %v1070
        %v1072 = vadd.f32 %v1068, %v1071
        %vm1073 = vweird.f32 %v1022
        %vm1074 = vweird.f32 %v1068
        %vm1075 = vmor %vm1073, %vm1074
        %v1076 = vsel %vm1075, %v1068, %v1072
        %v1077 = vand.u32 2147483647, %v1022
        %vm1078 = vcmp.eq.f32.partialorder %v1077, 8.507059e+37
        %v1079 = vand.u32 %v1022, 2147483648
        %v1080 = vor.u32 1.1754944e-38, %v1079
        %v1081 = vsel %vm1078, %v1080, %v1076
        %v1082 = vmul.f32 1.0, %v1081
        %v1083 = vmul.f32 %v996, %v1037
        %v1084 = vmul.f32 %v999, %v1052
        %v1085 = vmul.f32 %v1002, %v1067
        %v1086 = vmul.f32 %v1005, %v1082
        %v1087 = vld [vmem:[#allocation2] sm:$0xff]
        %v1088 = vld [vmem:[#allocation2 + $0x8] sm:$0xff]
        %v1089 = vld [vmem:[#allocation2 + $0x10] sm:$0xff]
        %v1090 = vld [vmem:[#allocation2 + $0x18] sm:$0xff]
        %v1091 = vld [vmem:[#allocation2 + $0x20] sm:$0xff]
        %v1092 = vld [vmem:[#allocation2 + $0x28] sm:$0xff]
        %v1093 = vld [vmem:[#allocation2 + $0x30] sm:$0xff]
        %v1094 = vld [vmem:[#allocation2 + $0x38] sm:$0xff]
        %v1095 = vld [vmem:[#allocation2 + $0x40] sm:$0xff]
        %v1096 = vld [vmem:[#allocation2 + $0x48] sm:$0xff]
        %v1097 = vld [vmem:[#allocation2 + $0x50] sm:$0xff]
        %v1098 = vld [vmem:[#allocation2 + $0x58] sm:$0xff]
        %v1099 = vld [vmem:[#allocation2 + $0x60] sm:$0xff]
        %v1100 = vld [vmem:[#allocation2 + $0x68] sm:$0xff]
        %v1101 = vld [vmem:[#allocation2 + $0x70] sm:$0xff]
        %v1102 = vld [vmem:[#allocation2 + $0x78] sm:$0xff]
        %v1103 = vld [vmem:[%s6] sm:$0x1]
        %v1105 = vperm.slane %v1103, 0
        %1107 = vmatpush.msra.mxu0 %v1102
        %1108 = vmatpush.msra.mxu0 %v1101
        %1109 = vmatpush.msra.mxu0 %v1100
        %1110 = vmatpush.msra.mxu0 %v1099
        %1111 = vmatpush.msra.mxu0 %v1098
        %1112 = vmatpush.msra.mxu0 %v1097
        %1113 = vmatpush.msra.mxu0 %v1096
        %1114 = vmatpush.msra.mxu0 %v1095
        %1115 = vmatpush.msra.mxu0 %v1094
        %1116 = vmatpush.msra.mxu0 %v1093
        %1117 = vmatpush.msra.mxu0 %v1092
        %1118 = vmatpush.msra.mxu0 %v1091
        %1119 = vmatpush.msra.mxu0 %v1090
        %1120 = vmatpush.msra.mxu0 %v1089
        %1121 = vmatpush.msra.mxu0 %v1088
        %1122 = vmatpush.msra.mxu0 %v1087
        %1123 = vmatmul.f32.gmra.mxu0 %v1083
        %v1124 = vpop.f32.mrf.mxu0
        %v1125 = vadd.f32 %v1105, %v1124
        %1126 = vmatmul.f32.gmra.mxu0 %v1084
        %v1127 = vpop.f32.mrf.mxu0
        %v1128 = vadd.f32 %v1105, %v1127
        %1129 = vmatmul.f32.gmra.mxu0 %v1085
        %v1130 = vpop.f32.mrf.mxu0
        %v1131 = vadd.f32 %v1105, %v1130
        %1132 = vmatmul.f32.gmra.mxu0 %v1086
        %v1133 = vpop.f32.mrf.mxu0
        %v1134 = vadd.f32 %v1105, %v1133
        %1135 = vdwg.mxu0
        %v1136 = vxor.u32 %v1125, 2147483648
        %v1137 = vxor.u32 %v1128, 2147483648
        %v1138 = vxor.u32 %v1131, 2147483648
        %v1139 = vxor.u32 %v1134, 2147483648
        %v1140 = vmul.f32 %v1136, 1.442695
        %v1141 = vpow.pop %v1140
        %v1142 = vmul.f32 %v1137, 1.442695
        %v1143 = vpow.pop %v1142
        %v1144 = vmul.f32 %v1138, 1.442695
        %v1145 = vpow.pop %v1144
        %v1146 = vmul.f32 %v1139, 1.442695
        %v1147 = vpow.pop %v1146
        %v1148 = vadd.f32 %v1141, 1.0
        %v1149 = vadd.f32 %v1143, 1.0
        %v1150 = vadd.f32 %v1145, 1.0
        %v1151 = vadd.f32 %v1147, 1.0
        %v1152 = vrcp.pop %v1148
        %v1153 = vmul.f32 %v1148, %v1152
        %v1154 = vsub.f32 1.0, %v1153
        %v1155 = vmul.f32 %v1152, %v1154
        %v1156 = vadd.f32 %v1152, %v1155
        %vm1157 = vweird.f32 %v1148
        %vm1158 = vweird.f32 %v1152
        %vm1159 = vmor %vm1157, %vm1158
        %v1160 = vsel %vm1159, %v1152, %v1156
        %v1161 = vand.u32 2147483647, %v1148
        %vm1162 = vcmp.eq.f32.partialorder %v1161, 8.507059e+37
        %v1163 = vand.u32 %v1148, 2147483648
        %v1164 = vor.u32 1.1754944e-38, %v1163
        %v1165 = vsel %vm1162, %v1164, %v1160
        %v1166 = vmul.f32 1.0, %v1165
        %v1167 = vrcp.pop %v1149
        %v1168 = vmul.f32 %v1149, %v1167
        %v1169 = vsub.f32 1.0, %v1168
        %v1170 = vmul.f32 %v1167, %v1169
        %v1171 = vadd.f32 %v1167, %v1170
        %vm1172 = vweird.f32 %v1149
        %vm1173 = vweird.f32 %v1167
        %vm1174 = vmor %vm1172, %vm1173
        %v1175 = vsel %vm1174, %v1167, %v1171
        %v1176 = vand.u32 2147483647, %v1149
        %vm1177 = vcmp.eq.f32.partialorder %v1176, 8.507059e+37
        %v1178 = vand.u32 %v1149, 2147483648
        %v1179 = vor.u32 1.1754944e-38, %v1178
        %v1180 = vsel %vm1177, %v1179, %v1175
        %v1181 = vmul.f32 1.0, %v1180
        %v1182 = vrcp.pop %v1150
        %v1183 = vmul.f32 %v1150, %v1182
        %v1184 = vsub.f32 1.0, %v1183
        %v1185 = vmul.f32 %v1182, %v1184
        %v1186 = vadd.f32 %v1182, %v1185
        %vm1187 = vweird.f32 %v1150
        %vm1188 = vweird.f32 %v1182
        %vm1189 = vmor %vm1187, %vm1188
        %v1190 = vsel %vm1189, %v1182, %v1186
        %v1191 = vand.u32 2147483647, %v1150
        %vm1192 = vcmp.eq.f32.partialorder %v1191, 8.507059e+37
        %v1193 = vand.u32 %v1150, 2147483648
        %v1194 = vor.u32 1.1754944e-38, %v1193
        %v1195 = vsel %vm1192, %v1194, %v1190
        %v1196 = vmul.f32 1.0, %v1195
        %v1197 = vrcp.pop %v1151
        %v1198 = vmul.f32 %v1151, %v1197
        %v1199 = vsub.f32 1.0, %v1198
        %v1200 = vmul.f32 %v1197, %v1199
        %v1201 = vadd.f32 %v1197, %v1200
        %vm1202 = vweird.f32 %v1151
        %vm1203 = vweird.f32 %v1197
        %vm1204 = vmor %vm1202, %vm1203
        %v1205 = vsel %vm1204, %v1197, %v1201
        %v1206 = vand.u32 2147483647, %v1151
        %vm1207 = vcmp.eq.f32.partialorder %v1206, 8.507059e+37
        %v1208 = vand.u32 %v1151, 2147483648
        %v1209 = vor.u32 1.1754944e-38, %v1208
        %v1210 = vsel %vm1207, %v1209, %v1205
        %v1211 = vmul.f32 1.0, %v1210
        %v1212 = vmul.f32 %v1125, %v1166
        %v1213 = vmul.f32 %v1128, %v1181
        %v1214 = vmul.f32 %v1131, %v1196
        %v1215 = vmul.f32 %v1134, %v1211
        %1216 = vst [vmem:[%s289] sm:$0xff] %v1212
        %1217 = vst [vmem:[%s289 + $0x8] sm:$0xff] %v1213
        %1218 = vst [vmem:[%s289 + $0x10] sm:$0xff] %v1214
        %1219 = vst [vmem:[%s289 + $0x18] sm:$0xff] %v1215
        %s1220 = sand.u32 %s182, 1
        %s1221 = scalar_lea.sflag [#allocation4], %s1220
        %s1222 = sand.u32 %s182, 1
        %s1223 = smul.addr %s1222, 32
        %s1224 = scalar_lea.vmem [#allocation5], %s1223
        // Predicated region
        $region53: #{sinusoidal_time_embedding.1} parent=47 // pred_check
          %p1225 = pneg %p192
        $region54: #{sinusoidal_time_embedding.1} parent=47 // pred_check_branch
          %1227 = sbr.rel (%p1225) target = $region56
        $region55: #{sinusoidal_time_embedding.1} parent=47 // pred_region
          %s1228 = smul.u32 4, %s22
          %1230 = vsyncadd %s1221, 0
          %s1231 = smul.addr %s1228, 8
          %s1232 = scalar_lea.hbm %s7, %s1231
          %s1233 = sshll.u32 %s1224, 4
          %s1234 = int_to_ptr.vmem [resolvable:$true] %s1233
          %s1235 = sshll.u32 %s1232, 4
          %s1236 = int_to_ptr.hbm [resolvable:$true] %s1235
          %1241 = dma.vmem_to_hbm [thread:$0]  %s1234, 512, %s1236, %s1221, 128, 128, 8
        $region56: #{sinusoidal_time_embedding.1} parent=47 // pred_fallthru
          _
      $region48: #{sinusoidal_time_embedding.1} parent=5 // pred_fallthru
        _
      %p1242 = scmp.le.s32.totalorder 2, %s17
      // Predicated region
      $region57: #{sinusoidal_time_embedding.1} parent=5 // pred_check
        %p1243 = pneg %p1242
      $region58: #{sinusoidal_time_embedding.1} parent=5 // pred_check_branch
        %1245 = sbr.rel (%p1243) target = $region60
      $region59: #{sinusoidal_time_embedding.1} parent=5 // pred_region
        %s1246 = ssub.s32 %s17, 2
        // Predicated region
        $region61: #{sinusoidal_time_embedding.1} parent=59 // pred_check
          %p1247 = pneg %p198
        $region62: #{sinusoidal_time_embedding.1} parent=59 // pred_check_branch
          %1249 = sbr.rel (%p1247) target = $region64
        $region63: #{sinusoidal_time_embedding.1} parent=59 // pred_region
          %s1250 = sand.u32 %s183, 1
          %s1251 = scalar_lea.sflag [#allocation4], %s1250
          %s1252 = sand.u32 %s183, 1
          %s1253 = smul.addr %s1252, 32
          %s1254 = scalar_lea.vmem [#allocation5], %s1253
          %1256 = dma.done %s1251, 512
        $region64: #{sinusoidal_time_embedding.1} parent=59 // pred_fallthru
          _
      $region60: #{sinusoidal_time_embedding.1} parent=5 // pred_fallthru
        _
    $region6: #{sinusoidal_time_embedding.1} parent=1 // loop_footer
      %s21 = sadd.s32 1, %s17
    $region7: #{sinusoidal_time_embedding.1} parent=1 // loop_footer_branch
      %16 = sbr.rel target = $region3
    $region8: #{sinusoidal_time_embedding.1} parent=1 // loop_exit
      _
    %1257 = vsyncpa [#allocation3], 1
    %s1258 = scalar_lea.sflag [#allocation3], 1
    %1259 = vsyncpa %s1258, 1
    %1260 = vsyncpa [#allocation4], 1
    %s1261 = scalar_lea.sflag [#allocation4], 1
    %1262 = vsyncpa %s1261, 1

</llo_original>
